<compile_context>
chip_gen: v7x
topology: tpu7x:2x2x1
jax: 0.10.0
libtpu: 0.0.40
codegen_flags: <defaults>
</compile_context>

<pallas_src>
import jax
import jax.numpy as jnp
from jax.experimental import pallas as pl
from jax.experimental.pallas import tpu as pltpu


def _chomp_copy_kernel(x_ref, o_ref):
    # Straight VMEM block copy.  Columns past l_out (output side) or past L
    # (input side) in trailing partial blocks are padded on load / masked on
    # writeback by Pallas, so they never corrupt HBM.
    o_ref[...] = x_ref[...]


def _vmem_budget_bytes() -> int:
    """Generation-aware VMEM budget for the double-buffered copy blocks."""
    cap = None
    try:
        info = pltpu.get_tpu_info()
        for name in ("vmem_capacity_bytes", "vmem_size_bytes", "vmem_bytes"):
            cap = getattr(info, name, None)
            if cap:
                break
    except Exception:
        cap = None
    if not cap:
        cap = 64 * 1024 * 1024  # assume the smallest per-core VMEM (v7x)
    # ~1/3 of visible VMEM for our blocks, capped at 40 MiB: big blocks on
    # 128 MiB v5e/v6e, ~21 MiB on a 64 MiB v7x TC, headroom for compiler scratch.
    return int(min(40 * 1024 * 1024, max(8 * 1024 * 1024, cap // 3)))


def chomp1d(x: jax.Array, chomp_size: int, *,
            block_rows: int | None = None,
            block_cols: int | None = None,
            vmem_budget_bytes: int | None = None) -> jax.Array:
    """Pallas equivalent of Chomp1d(chomp_size)(x) for x of shape (N, C, L)."""
    assert x.ndim == 3, "expected (N, C, L)"
    n, c, l = x.shape
    # chomp_size == 0 is a degenerate torch case (empty output); not supported.
    assert 0 < chomp_size < l, "chomp_size must be in (0, L)"
    l_out = l - chomp_size
    rows = n * c

    x2 = x.reshape(rows, l)  # metadata-only

    itemsize = x.dtype.itemsize
    lane = 128
    sublane = 8 * max(1, 4 // itemsize)        # f32: 8, bf16: 16, int8: 32
    l_out_pad = pl.cdiv(l_out, lane) * lane    # lane-padded output width

    if vmem_budget_bytes is None:
        vmem_budget_bytes = _vmem_budget_bytes()

    # Bytes per padded row per grid step: double-buffered input + output block.
    def bytes_per_row(cols: int) -> int:
        return 4 * cols * itemsize

    if block_cols is None:
        # Prefer full-width blocks (longest contiguous HBM bursts, lane-dense
        # writeback); tile the column axis only when even one sublane-tile of
        # full-width rows would not fit the budget (very long sequences).
        if sublane * bytes_per_row(l_out_pad) <= vmem_budget_bytes:
            block_cols = l_out_pad
        else:
            block_cols = (vmem_budget_bytes // (sublane * 4 * itemsize)) // lane * lane
            block_cols = min(max(lane, block_cols), l_out_pad)
    assert block_cols % lane == 0, "block_cols must be a multiple of 128"

    if block_rows is None:
        max_rows = max(sublane, vmem_budget_bytes // bytes_per_row(block_cols))
        if max_rows >= rows:
            block_rows = rows              # single row-block; full-dim is legal
        else:
            block_rows = max(sublane, (max_rows // sublane) * sublane)
    block_rows = min(block_rows, rows)
    assert block_rows == rows or block_rows % 8 == 0, \
        "block_rows must be a multiple of 8 or the full row count"

    # Layout-padded double-buffered footprint -> scoped-VMEM limit (+headroom).
    block_rows_pad = pl.cdiv(block_rows, sublane) * sublane
    footprint = 4 * block_rows_pad * block_cols * itemsize
    vmem_limit = int(min(60 * 1024 * 1024,
                         max(8 * 1024 * 1024, footprint + 2 * 1024 * 1024)))

    grid = (pl.cdiv(rows, block_rows), pl.cdiv(l_out, block_cols))

    out2 = pl.pallas_call(
        _chomp_copy_kernel,
        out_shape=jax.ShapeDtypeStruct((rows, l_out), x.dtype),
        grid=grid,
        in_specs=[pl.BlockSpec((block_rows, block_cols), lambda i, j: (i, j))],
        out_specs=pl.BlockSpec((block_rows, block_cols), lambda i, j: (i, j)),
        compiler_params=pltpu.CompilerParams(
            dimension_semantics=("parallel", "parallel"),
            vmem_limit_bytes=vmem_limit,
        ),
    )(x2)

    return out2.reshape(n, c, l_out)


if __name__ == "__main__":
    key = jax.random.PRNGKey(0)

    # Case 1: small TCN-style shape; l_out (13) < 128 -> single full-row block,
    # contiguous read of the whole row, masked lane writeback.
    N, C, L = 2, 4, 16
    chomp_size = 3
    x = jax.random.normal(key, (N, C, L), dtype=jnp.float32)
    out = jax.block_until_ready(chomp1d(x, chomp_size))
    assert out.shape == (N, C, L - chomp_size)
    assert out.dtype == x.dtype
    assert jnp.array_equal(out, x[:, :, :-chomp_size])

    # Case 2: lane-aligned l_out (128), multiple row blocks with a partial
    # trailing row block (80 = 32 + 32 + 16); chomped tail never read.
    N2, C2, L2, chomp2 = 5, 16, 160, 32
    x2 = jax.random.normal(jax.random.PRNGKey(1), (N2, C2, L2), dtype=jnp.float32)
    out2 = jax.block_until_ready(chomp1d(x2, chomp2, block_rows=32))
    assert jnp.array_equal(out2, x2[:, :, :-chomp2])

    # Case 3: bf16, non-aligned l_out (263), column tiling with partial row AND
    # column blocks, and an input column block clipped at L.
    N3, C3, L3, chomp3 = 3, 7, 300, 37
    x3 = jax.random.normal(jax.random.PRNGKey(2), (N3, C3, L3), dtype=jnp.bfloat16)
    out3 = jax.block_until_ready(chomp1d(x3, chomp3, block_rows=16, block_cols=128))
    assert out3.shape == (N3, C3, L3 - chomp3)
    assert jnp.array_equal(out3, x3[:, :, :-chomp3])

    print("KERNEL_OK")
</pallas_src>

<mosaic_0001>
module attributes {stable_mosaic.version = 11 : i64} {
  func.func @_chomp_copy_kernel(%arg0: i32, %arg1: i32, %arg2: memref<8x128xf32, #tpu.memory_space<vmem>>, %arg3: memref<8x128xf32, #tpu.memory_space<vmem>>) attributes {dimension_semantics = [#tpu.dimension_semantics<parallel>, #tpu.dimension_semantics<parallel>], iteration_bounds = array<i64: 1, 1>, scalar_prefetch = 0 : i64, scratch_operands = 0 : i64, tpu.core_type = #tpu.core_type<tc>, window_params = [{transform_indices = @transform_0, window_bounds = array<i64: 8, 128>}, {transform_indices = @transform_1, window_bounds = array<i64: 8, 128>}]} {
    %c0 = arith.constant 0 : index
    %c0_0 = arith.constant 0 : index
    %0 = vector.load %arg2[%c0, %c0_0] : memref<8x128xf32, #tpu.memory_space<vmem>>, vector<8x128xf32>
    %c0_1 = arith.constant 0 : index
    %c0_2 = arith.constant 0 : index
    %1 = vector.load %arg3[%c0_1, %c0_2] : memref<8x128xf32, #tpu.memory_space<vmem>>, vector<8x128xf32>
    tpu.vector_store %arg3[%c0_1, %c0_2], %0 {strides = array<i32>} : memref<8x128xf32, #tpu.memory_space<vmem>>, vector<8x128xf32>,
    return
  }
  func.func @transform_0(%arg0: i32, %arg1: i32) -> (i32, i32) {
    %c0_i32 = arith.constant 0 : i32
    return %arg0, %arg1 : i32, i32
  }
  func.func @transform_1(%arg0: i32, %arg1: i32) -> (i32, i32) {
    %c0_i32 = arith.constant 0 : i32
    return %arg0, %arg1 : i32, i32
  }
}

</mosaic_0001>

<llo_original>
// kernel: tpu_custom_call.1
$region0: #{tpu_custom_call.1}
  #allocation0 [shape = 'u32[]', space=smem, size = 0x4, offset = 0x4, fixed_abs, tag = 'smem constant byte address 0x4 - core index']
  #allocation1 [shape = 'u32[144,128]{1,0:T(1,128)}', space=vmem, size = 0x12000, scoped, tag = 'internal scratch']
  %s0 = inlined_call_operand.hbm [shape: f32[8,16], index: 0, kind: input, shape index: {}]
  %s1 = inlined_call_operand.hbm [shape: f32[8,13], index: 1, kind: output, shape index: {}]
  %s2 = sld [smem:[#allocation0]]
  $region18: #{tpu_custom_call.1} parent=0
    _
  %s4 = ssub.s32 1, %s2
  %s5 = scalar_select 0, %s4, %s2
  $region1: #{tpu_custom_call.1} parent=0
    #allocation2 [shape = 'u8[4096]{0}', space=vmem, size = 0x1000, scoped, tag = 'input window, operand 0, single buffered']
    #allocation3 [shape = 's32[1]{0}', space=sflag, size = 0x4, scoped, tag = 'scoped memory for tpu_custom_call.1']
    #allocation4 [shape = 's32[1]{0}', space=sflag, size = 0x4, scoped, tag = 'scoped memory for tpu_custom_call.1']
    #allocation5 [shape = 'u8[4096]{0}', space=vmem, size = 0x1000, scoped, tag = 'output window, operand 0, single buffered']
    %6 = vsyncpa [#allocation3], 0
    %7 = vsyncpa [#allocation4], 0
    // Predicated region
    $region2: #{tpu_custom_call.1} parent=1 // pred_check
      _
    $region3: #{tpu_custom_call.1} parent=1 // pred_check_branch
      %9 = sbr.rel (0) target = $region5
    $region4: #{tpu_custom_call.1} parent=1 // pred_region
      %s11 = ssub.s32 128, 128
      %12 = vsyncadd [#allocation3], %s11
      %s14 = sshll.u32 [#allocation2], 4
      %s15 = int_to_ptr.vmem [resolvable:$true] %s14
      %17 = dma.hbm_to_vmem [thread:$0]  %s0, 128, %s15, [#allocation3]
    $region5: #{tpu_custom_call.1} parent=1 // pred_fallthru
      _
    // Predicated region
    $region6: #{tpu_custom_call.1} parent=1 // pred_check
      _
    $region7: #{tpu_custom_call.1} parent=1 // pred_check_branch
      %19 = sbr.rel (0) target = $region9
    $region8: #{tpu_custom_call.1} parent=1 // pred_region
      %20 = dma.done [#allocation3], 128
    $region9: #{tpu_custom_call.1} parent=1 // pred_fallthru
      _
    %v21 = vld [vmem:[#allocation2] sm:$0xff]
    %22 = vst [vmem:[#allocation5] sm:$0xff] %v21
    // Predicated region
    $region10: #{tpu_custom_call.1} parent=1 // pred_check
      _
    $region11: #{tpu_custom_call.1} parent=1 // pred_check_branch
      %24 = sbr.rel (0) target = $region13
    $region12: #{tpu_custom_call.1} parent=1 // pred_region
      %s26 = ssub.s32 128, 128
      %27 = vsyncadd [#allocation4], %s26
      %s29 = sshll.u32 [#allocation5], 4
      %s30 = int_to_ptr.vmem [resolvable:$true] %s29
      %32 = dma.vmem_to_hbm [thread:$0]  %s30, 128, %s1, [#allocation4]
    $region13: #{tpu_custom_call.1} parent=1 // pred_fallthru
      _
    // Predicated region
    $region14: #{tpu_custom_call.1} parent=1 // pred_check
      _
    $region15: #{tpu_custom_call.1} parent=1 // pred_check_branch
      %34 = sbr.rel (0) target = $region17
    $region16: #{tpu_custom_call.1} parent=1 // pred_region
      %35 = dma.done [#allocation4], 128
    $region17: #{tpu_custom_call.1} parent=1 // pred_fallthru
      _
    %36 = vsyncpa [#allocation3], 1
    %37 = vsyncpa [#allocation4], 1

</llo_original>
